<compile_context>
chip_gen: v5e
topology: v5e:2x2
jax: 0.10.0
libtpu: 0.0.40
codegen_flags: <defaults>
</compile_context>

<pallas_src>
import jax
import jax.numpy as jnp
from jax.experimental import pallas as pl
from jax.experimental.pallas import tpu as pltpu

_KSIZE = 31   # avg_pool2d kernel size
_PAD = 15     # avg_pool2d padding (count_include_pad=True -> divide by 31*31 always)


def _structure_loss_body(ah_ref, aw_ref, pred_ref, mask_ref, out_ref):
    x = pred_ref[...]                     # (TB, H, W) f32 logits
    y = mask_ref[...]                     # (TB, H, W) f32 targets
    tb, h, w = x.shape
    ah = ah_ref[...]                      # (H, H) bf16 band matrix, 1/31 folded in
    aw = aw_ref[...]                      # (W, W) bf16 band matrix, 1/31 folded in

    # 31x31 box average pool (stride 1, pad 15, count_include_pad=True) expressed as
    # two banded bf16 matmuls with f32 accumulation: pooled = (AH/31) @ y @ (AW/31).
    if h % 8 == 0:
        # W-contraction as one flattened, M-dense MXU matmul: (TB*H, W) @ (W, W).
        tmp = jnp.dot(y.reshape(tb * h, w).astype(jnp.bfloat16), aw,
                      preferred_element_type=jnp.float32)
        tmp = tmp.reshape(tb, h, w).astype(jnp.bfloat16)
    else:
        tmp = jnp.einsum('thw,twv->thv', y.astype(jnp.bfloat16),
                         jnp.broadcast_to(aw, (tb, w, w)),
                         preferred_element_type=jnp.float32).astype(jnp.bfloat16)
    # H-contraction as a batched matmul against the (shared) band matrix.
    pooled = jnp.einsum('thk,tkw->thw', jnp.broadcast_to(ah, (tb, h, h)), tmp,
                        preferred_element_type=jnp.float32)

    weit = 1.0 + 5.0 * jnp.abs(pooled - y)

    # Stable BCE-with-logits and sigmoid sharing a single exp per element; the
    # divide is routed to the EUP reciprocal (its own VLIW slot).
    e = jnp.exp(-jnp.abs(x))
    bce = jnp.maximum(x, 0.0) - x * y + jnp.log1p(e)
    r = pl.reciprocal(1.0 + e, approx=True)
    sig = jnp.where(x >= 0.0, r, e * r)

    def _rowsum(v):                        # (TB, H, W) -> (TB, 1)
        return jnp.sum(jnp.sum(v, axis=2), axis=1, keepdims=True)

    # Single merged (TB, 3) output block per step: [bce_sum, inter, union] per slice.
    out_ref[0, :, 0:1] = _rowsum(bce)
    out_ref[0, :, 1:2] = _rowsum(sig * y * weit)
    out_ref[0, :, 2:3] = _rowsum((sig + y) * weit)


def _kernel_shared_band(a_ref, pred_ref, mask_ref, out_ref):
    # H == W: one band matrix serves both contractions (halves band VMEM + one DMA).
    _structure_loss_body(a_ref, a_ref, pred_ref, mask_ref, out_ref)


def _kernel_split_band(ah_ref, aw_ref, pred_ref, mask_ref, out_ref):
    _structure_loss_body(ah_ref, aw_ref, pred_ref, mask_ref, out_ref)


def _band_matrix(n):
    idx = jnp.arange(n)
    band = (jnp.abs(idx[:, None] - idx[None, :]) <= _PAD).astype(jnp.float32)
    # fold 1/31 into each side of the separable box filter -> total scale 1/961
    return (band * (1.0 / _KSIZE)).astype(jnp.bfloat16)


def _choose_tb(bc, h, w):
    # ~12 live f32 (TB, H, W) slabs: 2 inputs x 2 pipeline buffers + ~8 temporaries.
    budget = 24 * 1024 * 1024
    tb = max(1, budget // (48 * h * w))
    tb = min(tb, 256, bc)
    if bc >= 2:
        # keep at least 2 grid steps so both v7x TensorCores get work
        tb = min(tb, -(-bc // 2))
    return int(tb)


def structure_loss_pallas(pred, mask, weight=1.0):
    """Pallas implementation of StructureLoss.forward (pred, mask are NCHW)."""
    B, C, H, W = pred.shape
    BC = B * C
    pred3 = pred.reshape(BC, H, W).astype(jnp.float32)
    mask3 = mask.reshape(BC, H, W).astype(jnp.float32)

    TB = _choose_tb(BC, H, W)
    steps = -(-BC // TB)
    BC_pad = steps * TB
    if BC_pad != BC:
        padn = BC_pad - BC
        pred3 = jnp.pad(pred3, ((0, padn), (0, 0), (0, 0)))
        mask3 = jnp.pad(mask3, ((0, padn), (0, 0), (0, 0)))

    shared = (H == W)
    bands = (_band_matrix(H),) if shared else (_band_matrix(H), _band_matrix(W))
    band_specs = [pl.BlockSpec((H, H), lambda i: (0, 0))]
    if not shared:
        band_specs.append(pl.BlockSpec((W, W), lambda i: (0, 0)))

    io_spec = pl.BlockSpec((TB, H, W), lambda i: (i, 0, 0))
    out_spec = pl.BlockSpec((1, TB, 3), lambda i: (i, 0, 0))

    # explicit VMEM budget (v5e scoped default is 16 MiB; v7x has 64 MiB physical)
    est = 48 * TB * H * W + 8 * (H * H + W * W)
    vmem_limit = int(min(48 * 2**20, max(32 * 2**20, 2 * est)))

    out = pl.pallas_call(
        _kernel_shared_band if shared else _kernel_split_band,
        out_shape=jax.ShapeDtypeStruct((steps, TB, 3), jnp.float32),
        grid=(steps,),
        in_specs=band_specs + [io_spec, io_spec],
        out_specs=out_spec,
        compiler_params=pltpu.CompilerParams(
            dimension_semantics=("parallel",),
            vmem_limit_bytes=vmem_limit),
    )(*bands, pred3, mask3)

    out = out.reshape(BC_pad, 3)[:BC]
    bce_sum, inter, union = out[:, 0], out[:, 1], out[:, 2]

    # NOTE: F.binary_cross_entropy_with_logits(..., reduce='none') hits the legacy
    # `reduce` argument; a truthy string resolves to reduction='mean', so `wbce` is the
    # SCALAR mean BCE over all elements and the per-(b,c) (weit*wbce).sum/weit.sum
    # collapses exactly back to that scalar (faithful to the PyTorch module).
    wbce = jnp.sum(bce_sum) / (BC * H * W)

    inter = inter.reshape(B, C)
    union = union.reshape(B, C)
    wiou = 1.0 - (inter + 1.0) / (union - inter + 1.0)
    return weight * jnp.mean(wbce + wiou)


if __name__ == "__main__":
    key = jax.random.PRNGKey(0)
    k1, k2 = jax.random.split(key)
    B, C, H, W = 2, 4, 32, 32
    pred = jax.random.normal(k1, (B, C, H, W), dtype=jnp.float32)     # logits
    mask = jax.random.uniform(k2, (B, C, H, W), dtype=jnp.float32)    # soft mask in [0, 1]

    loss = structure_loss_pallas(pred, mask, weight=1.0)
    jax.block_until_ready(loss)
    assert loss.shape == () and bool(jnp.isfinite(loss))
    print("KERNEL_OK")
</pallas_src>

<mosaic_0001>
module attributes {stable_mosaic.version = 11 : i64} {
  func.func @_kernel_shared_band(%arg0: i32, %arg1: memref<32x32xbf16, #tpu.memory_space<vmem>>, %arg2: memref<4x32x32xf32, #tpu.memory_space<vmem>>, %arg3: memref<4x32x32xf32, #tpu.memory_space<vmem>>, %arg4: memref<1x4x3xf32, #tpu.memory_space<vmem>>) attributes {dimension_semantics = [#tpu.dimension_semantics<parallel>], iteration_bounds = array<i64: 2>, scalar_prefetch = 0 : i64, scratch_operands = 0 : i64, tpu.core_type = #tpu.core_type<tc>, window_params = [{pipeline_mode = #tpu.pipeline_mode<synchronous>, transform_indices = @transform_0, window_bounds = array<i64: 32, 32>}, {transform_indices = @transform_1, window_bounds = array<i64: 4, 32, 32>}, {transform_indices = @transform_2, window_bounds = array<i64: 4, 32, 32>}, {transform_indices = @transform_3, window_bounds = array<i64: 1, 4, 3>}]} {
    %c0 = arith.constant 0 : index
    %c0_0 = arith.constant 0 : index
    %c0_1 = arith.constant 0 : index
    %0 = vector.load %arg2[%c0, %c0_0, %c0_1] : memref<4x32x32xf32, #tpu.memory_space<vmem>>, vector<4x32x32xf32>
    %c0_2 = arith.constant 0 : index
    %c0_3 = arith.constant 0 : index
    %c0_4 = arith.constant 0 : index
    %1 = vector.load %arg3[%c0_2, %c0_3, %c0_4] : memref<4x32x32xf32, #tpu.memory_space<vmem>>, vector<4x32x32xf32>
    %c0_5 = arith.constant 0 : index
    %c0_6 = arith.constant 0 : index
    %2 = vector.load %arg1[%c0_5, %c0_6] : memref<32x32xbf16, #tpu.memory_space<vmem>>, vector<32x32xbf16>
    %c0_7 = arith.constant 0 : index
    %c0_8 = arith.constant 0 : index
    %3 = vector.load %arg1[%c0_7, %c0_8] : memref<32x32xbf16, #tpu.memory_space<vmem>>, vector<32x32xbf16>
    %4 = vector.shape_cast %1 : vector<4x32x32xf32> to vector<128x32xf32>
    %5 = arith.truncf %4 : vector<128x32xf32> to vector<128x32xbf16>
    %cst = arith.constant dense<0.000000e+00> : vector<128x32xf32>
    %6 = tpu.matmul %5, %3, %cst {dimension_numbers = #tpu.dot_dimension_numbers<[1], [0], [0], [1], [0, 0, 1, 1], [], []>} : vector<128x32xbf16>, vector<32x32xbf16>, vector<128x32xf32> -> vector<128x32xf32>
    %7 = vector.shape_cast %6 : vector<128x32xf32> to vector<4x32x32xf32>
    %8 = arith.truncf %7 : vector<4x32x32xf32> to vector<4x32x32xbf16>
    %9 = vector.shape_cast %2 : vector<32x32xbf16> to vector<1x32x32xbf16>
    %10 = vector.broadcast %9 : vector<1x32x32xbf16> to vector<4x32x32xbf16>
    "tpu.trace_start"() <{level = 10 : i32, message = "thk,tkw->thw"}> : () -> ()
    %cst_9 = arith.constant dense<0.000000e+00> : vector<4x32x32xf32>
    %11 = tpu.matmul %10, %8, %cst_9 {dimension_numbers = #tpu.dot_dimension_numbers<[2], [1], [1], [2], [0, 0, 0, 1, 1, 2], [0], [0]>} : vector<4x32x32xbf16>, vector<4x32x32xbf16>, vector<4x32x32xf32> -> vector<4x32x32xf32>
    "tpu.trace_stop"() : () -> ()
    %12 = arith.subf %11, %1 : vector<4x32x32xf32>
    %13 = math.absf %12 : vector<4x32x32xf32>
    %cst_10 = arith.constant 5.000000e+00 : f32
    %14 = vector.broadcast %cst_10 : f32 to vector<4x32x32xf32>
    %15 = arith.mulf %14, %13 : vector<4x32x32xf32>
    %cst_11 = arith.constant 1.000000e+00 : f32
    %16 = vector.broadcast %cst_11 : f32 to vector<4x32x32xf32>
    %17 = arith.addf %16, %15 : vector<4x32x32xf32>
    %18 = math.absf %0 : vector<4x32x32xf32>
    %cst_12 = arith.constant 0.000000e+00 : f32
    %19 = vector.broadcast %cst_12 : f32 to vector<4x32x32xf32>
    %20 = arith.subf %19, %18 : vector<4x32x32xf32>
    %21 = math.exp %20 : vector<4x32x32xf32>
    %cst_13 = arith.constant 0.000000e+00 : f32
    %22 = vector.broadcast %cst_13 : f32 to vector<4x32x32xf32>
    %23 = arith.maximumf %0, %22 : vector<4x32x32xf32>
    %24 = arith.mulf %0, %1 : vector<4x32x32xf32>
    %25 = arith.subf %23, %24 : vector<4x32x32xf32>
    %26 = math.log1p %21 : vector<4x32x32xf32>
    %27 = arith.addf %25, %26 : vector<4x32x32xf32>
    %cst_14 = arith.constant 1.000000e+00 : f32
    %28 = vector.broadcast %cst_14 : f32 to vector<4x32x32xf32>
    %29 = arith.addf %28, %21 : vector<4x32x32xf32>
    %30 = tpu.reciprocal %29 {approx = true} : vector<4x32x32xf32> -> vector<4x32x32xf32>
    %cst_15 = arith.constant 0.000000e+00 : f32
    %31 = vector.broadcast %cst_15 : f32 to vector<4x32x32xf32>
    %32 = arith.cmpf oge, %0, %31 : vector<4x32x32xf32>
    %33 = arith.mulf %21, %30 : vector<4x32x32xf32>
    %34 = arith.select %32, %30, %33 : vector<4x32x32xi1>, vector<4x32x32xf32>
    %cst_16 = arith.constant dense<0.000000e+00> : vector<4x32xf32>
    %35 = vector.multi_reduction <add>, %27, %cst_16 [2] : vector<4x32x32xf32> to vector<4x32xf32>
    %cst_17 = arith.constant dense<0.000000e+00> : vector<4xf32>
    %36 = vector.multi_reduction <add>, %35, %cst_17 [1] : vector<4x32xf32> to vector<4xf32>
    %37 = vector.shape_cast %36 : vector<4xf32> to vector<4x1xf32>
    %c0_18 = arith.constant 0 : index
    %c0_19 = arith.constant 0 : index
    %c0_20 = arith.constant 0 : index
    %38 = vector.load %arg4[%c0_18, %c0_19, %c0_20] : memref<1x4x3xf32, #tpu.memory_space<vmem>>, vector<1x4x1xf32>
    %39 = vector.shape_cast %38 : vector<1x4x1xf32> to vector<4x1xf32>
    %40 = vector.shape_cast %37 : vector<4x1xf32> to vector<1x4x1xf32>
    tpu.vector_store %arg4[%c0_18, %c0_19, %c0_20], %40 {strides = array<i32>} : memref<1x4x3xf32, #tpu.memory_space<vmem>>, vector<1x4x1xf32>,
    %41 = arith.mulf %34, %1 : vector<4x32x32xf32>
    %42 = arith.mulf %41, %17 : vector<4x32x32xf32>
    %cst_21 = arith.constant dense<0.000000e+00> : vector<4x32xf32>
    %43 = vector.multi_reduction <add>, %42, %cst_21 [2] : vector<4x32x32xf32> to vector<4x32xf32>
    %cst_22 = arith.constant dense<0.000000e+00> : vector<4xf32>
    %44 = vector.multi_reduction <add>, %43, %cst_22 [1] : vector<4x32xf32> to vector<4xf32>
    %45 = vector.shape_cast %44 : vector<4xf32> to vector<4x1xf32>
    %c0_23 = arith.constant 0 : index
    %c0_24 = arith.constant 0 : index
    %c1 = arith.constant 1 : index
    %46 = vector.load %arg4[%c0_23, %c0_24, %c1] : memref<1x4x3xf32, #tpu.memory_space<vmem>>, vector<1x4x1xf32>
    %47 = vector.shape_cast %46 : vector<1x4x1xf32> to vector<4x1xf32>
    %48 = vector.shape_cast %45 : vector<4x1xf32> to vector<1x4x1xf32>
    tpu.vector_store %arg4[%c0_23, %c0_24, %c1], %48 {strides = array<i32>} : memref<1x4x3xf32, #tpu.memory_space<vmem>>, vector<1x4x1xf32>,
    %49 = arith.addf %34, %1 : vector<4x32x32xf32>
    %50 = arith.mulf %49, %17 : vector<4x32x32xf32>
    %cst_25 = arith.constant dense<0.000000e+00> : vector<4x32xf32>
    %51 = vector.multi_reduction <add>, %50, %cst_25 [2] : vector<4x32x32xf32> to vector<4x32xf32>
    %cst_26 = arith.constant dense<0.000000e+00> : vector<4xf32>
    %52 = vector.multi_reduction <add>, %51, %cst_26 [1] : vector<4x32xf32> to vector<4xf32>
    %53 = vector.shape_cast %52 : vector<4xf32> to vector<4x1xf32>
    %c0_27 = arith.constant 0 : index
    %c0_28 = arith.constant 0 : index
    %c2 = arith.constant 2 : index
    %54 = vector.load %arg4[%c0_27, %c0_28, %c2] : memref<1x4x3xf32, #tpu.memory_space<vmem>>, vector<1x4x1xf32>
    %55 = vector.shape_cast %54 : vector<1x4x1xf32> to vector<4x1xf32>
    %56 = vector.shape_cast %53 : vector<4x1xf32> to vector<1x4x1xf32>
    tpu.vector_store %arg4[%c0_27, %c0_28, %c2], %56 {strides = array<i32>} : memref<1x4x3xf32, #tpu.memory_space<vmem>>, vector<1x4x1xf32>,
    return
  }
  func.func @transform_0(%arg0: i32) -> (i32, i32) {
    %c0_i32 = arith.constant 0 : i32
    %c0_i32_0 = arith.constant 0 : i32
    %c0_i32_1 = arith.constant 0 : i32
    return %c0_i32, %c0_i32_0 : i32, i32
  }
  func.func @transform_1(%arg0: i32) -> (i32, i32, i32) {
    %c0_i32 = arith.constant 0 : i32
    %c0_i32_0 = arith.constant 0 : i32
    %c0_i32_1 = arith.constant 0 : i32
    return %arg0, %c0_i32, %c0_i32_0 : i32, i32, i32
  }
  func.func @transform_2(%arg0: i32) -> (i32, i32, i32) {
    %c0_i32 = arith.constant 0 : i32
    %c0_i32_0 = arith.constant 0 : i32
    %c0_i32_1 = arith.constant 0 : i32
    return %arg0, %c0_i32, %c0_i32_0 : i32, i32, i32
  }
  func.func @transform_3(%arg0: i32) -> (i32, i32, i32) {
    %c0_i32 = arith.constant 0 : i32
    %c0_i32_0 = arith.constant 0 : i32
    %c0_i32_1 = arith.constant 0 : i32
    return %arg0, %c0_i32, %c0_i32_0 : i32, i32, i32
  }
}

</mosaic_0001>

<llo_original>
// kernel: tpu_custom_call.1
$region0: #{tpu_custom_call.1}
  #allocation0 [shape = 'u32[]', space=smem, size = 0x4, offset = 0x4, fixed_abs, tag = 'smem constant byte address 0x4 - core index']
  #allocation1 [shape = 'u32[72,128]{1,0:T(1,128)}', space=vmem, size = 0x9000, scoped, tag = 'internal scratch']
  %s0 = inlined_call_operand.hbm [shape: bf16[32,32], index: 0, kind: input, shape index: {}]
  %s1 = inlined_call_operand.hbm [shape: f32[8,32,32], index: 1, kind: input, shape index: {}]
  %s2 = inlined_call_operand.hbm [shape: f32[8,32,32], index: 2, kind: input, shape index: {}]
  %s3 = inlined_call_operand.vmem [shape: f32[2,4,3], index: 3, kind: output, shape index: {}]
  %s4 = sld [smem:[#allocation0]]
  $region57: #{tpu_custom_call.1} parent=0
    _
  %s6 = ssub.s32 1, %s4
  %s7 = scalar_select 0, %s6, %s4
  $region1: #{tpu_custom_call.1} parent=0
    #allocation2 [shape = 'u8[8192]{0}', space=vmem, size = 0x2000, scoped, tag = 'input window, operand 0, single buffered']
    #allocation3 [shape = 's32[2]{0}', space=sflag, size = 0x8, scoped, tag = 'scoped memory for tpu_custom_call.1']
    #allocation4 [shape = 'u8[131072]{0}', space=vmem, size = 0x20000, scoped, tag = 'input window, operand 1']
    #allocation5 [shape = 's32[2]{0}', space=sflag, size = 0x8, scoped, tag = 'scoped memory for tpu_custom_call.1']
    #allocation6 [shape = 'u8[131072]{0}', space=vmem, size = 0x20000, scoped, tag = 'input window, operand 2']
    %8 = vsyncpa [#allocation3], 0
    %9 = vsyncpa [#allocation5], 0
    %s10 = scalar_lea.sflag [#allocation5], 1
    %11 = vsyncpa %s10, 0
    loop: start=0, step=1, limit=4
    $region2: #{tpu_custom_call.1} parent=1 // loop_pre_header
      _
    $region3: #{tpu_custom_call.1} parent=1 // loop_header
      %s13 = sphi 0, %s17
      %p14 = scmp.ge.s32.totalorder %s13, 4
      %s21 = sphi 0, %s21
      %s23 = sphi 0, %s21
      %s24 = sphi 0, %s23
      %s38 = sphi 0, %s24
      %s44 = sphi 0, %s46
      %s47 = sphi 0, %s44
      %s48 = sphi 0, %s47
      %s64 = sphi 0, %s48
      %s70 = sphi 0, %s72
      %s73 = sphi 0, %s70
      %s74 = sphi 0, %s73
      %s90 = sphi 0, %s74
      %s96 = sphi 0, %s98
      %s99 = sphi 0, %s96
      %s100 = sphi 0, %s99
      %s116 = sphi 0, %s100
    $region4: #{tpu_custom_call.1} parent=1 // loop_header_branch
      %16 = sbr.rel (%p14) target = $region8
    $region5: #{tpu_custom_call.1} parent=1 // loop_body
      %s18 = ssub.s32 %s13, 1
      %s19 = ssub.s32 %s13, 2
      %s20 = sadd.s32 %s13, 1
      %s22 = sadd.s32 %s21, 1
      %p25 = scmp.eq.s32.totalorder %s13, 1
      %p26 = scmp.ne.s32.totalorder %s21, %s23
      %p27 = scmp.eq.s32.totalorder %s13, 0
      %p28 = por %p26, %p27
      %p29 = scmp.ne.s32.totalorder %s21, %s23
      %p30 = scmp.eq.s32.totalorder %s18, 1
      %p31 = por %p29, %p30
      %p32 = scmp.ne.s32.totalorder %s23, %s24
      %p33 = scmp.eq.s32.totalorder %s18, 0
      %p34 = por %p32, %p33
      %p35 = scmp.ne.s32.totalorder %s23, %s24
      %p36 = scmp.eq.s32.totalorder %s19, 1
      %p37 = por %p35, %p36
      %p39 = scmp.ne.s32.totalorder %s24, %s38
      %p40 = scmp.eq.s32.totalorder %s19, 0
      %p41 = por %p39, %p40
      %s42 = ssub.s32 %s13, %s20
      %p43 = scmp.eq.s32.totalorder %s42, 0
      %s45 = sadd.s32 %s44, 1
      %s46 = scalar_select %p43, %s44, %s45
      %p49 = pneg %p43
      %p50 = scmp.eq.s32.totalorder %s13, 1
      %p51 = por %p49, %p50
      %p52 = scmp.ne.s32.totalorder %s44, %s47
      %p53 = scmp.eq.s32.totalorder %s13, 0
      %p54 = por %p52, %p53
      %p55 = scmp.ne.s32.totalorder %s44, %s47
      %p56 = scmp.eq.s32.totalorder %s18, 1
      %p57 = por %p55, %p56
      %p58 = scmp.ne.s32.totalorder %s47, %s48
      %p59 = scmp.eq.s32.totalorder %s18, 0
      %p60 = por %p58, %p59
      %p61 = scmp.ne.s32.totalorder %s47, %s48
      %p62 = scmp.eq.s32.totalorder %s19, 1
      %p63 = por %p61, %p62
      %p65 = scmp.ne.s32.totalorder %s48, %s64
      %p66 = scmp.eq.s32.totalorder %s19, 0
      %p67 = por %p65, %p66
      %s68 = ssub.s32 %s13, %s20
      %p69 = scmp.eq.s32.totalorder %s68, 0
      %s71 = sadd.s32 %s70, 1
      %s72 = scalar_select %p69, %s70, %s71
      %p75 = pneg %p69
      %p76 = scmp.eq.s32.totalorder %s13, 1
      %p77 = por %p75, %p76
      %p78 = scmp.ne.s32.totalorder %s70, %s73
      %p79 = scmp.eq.s32.totalorder %s13, 0
      %p80 = por %p78, %p79
      %p81 = scmp.ne.s32.totalorder %s70, %s73
      %p82 = scmp.eq.s32.totalorder %s18, 1
      %p83 = por %p81, %p82
      %p84 = scmp.ne.s32.totalorder %s73, %s74
      %p85 = scmp.eq.s32.totalorder %s18, 0
      %p86 = por %p84, %p85
      %p87 = scmp.ne.s32.totalorder %s73, %s74
      %p88 = scmp.eq.s32.totalorder %s19, 1
      %p89 = por %p87, %p88
      %p91 = scmp.ne.s32.totalorder %s74, %s90
      %p92 = scmp.eq.s32.totalorder %s19, 0
      %p93 = por %p91, %p92
      %s94 = ssub.s32 %s13, %s20
      %p95 = scmp.eq.s32.totalorder %s94, 0
      %s97 = sadd.s32 %s96, 1
      %s98 = scalar_select %p95, %s96, %s97
      %p101 = pneg %p95
      %p102 = scmp.eq.s32.totalorder %s13, 1
      %p103 = por %p101, %p102
      %p104 = scmp.ne.s32.totalorder %s96, %s99
      %p105 = scmp.eq.s32.totalorder %s13, 0
      %p106 = por %p104, %p105
      %p107 = scmp.ne.s32.totalorder %s96, %s99
      %p108 = scmp.eq.s32.totalorder %s18, 1
      %p109 = por %p107, %p108
      %p110 = scmp.ne.s32.totalorder %s99, %s100
      %p111 = scmp.eq.s32.totalorder %s18, 0
      %p112 = por %p110, %p111
      %p113 = scmp.ne.s32.totalorder %s99, %s100
      %p114 = scmp.eq.s32.totalorder %s19, 1
      %p115 = por %p113, %p114
      %p117 = scmp.ne.s32.totalorder %s100, %s116
      %p118 = scmp.eq.s32.totalorder %s19, 0
      %p119 = por %p117, %p118
      %p120 = scmp.le.s32.totalorder 1, %s13
      %p121 = scmp.lt.s32.totalorder %s13, 3
      %p122 = pnand %p120, %p121
      %p123 = pneg %p122
      // Predicated region
      $region9: #{tpu_custom_call.1} parent=5 // pred_check
        _
      $region10: #{tpu_custom_call.1} parent=5 // pred_check_branch
        %125 = sbr.rel (%p122) target = $region12
      $region11: #{tpu_custom_call.1} parent=5 // pred_region
        %s126 = ssub.s32 %s13, 1
        // Predicated region
        $region13: #{tpu_custom_call.1} parent=11 // pred_check
          %p127 = pneg %p34
        $region14: #{tpu_custom_call.1} parent=11 // pred_check_branch
          %129 = sbr.rel (%p127) target = $region16
        $region15: #{tpu_custom_call.1} parent=11 // pred_region
          %131 = vsyncadd [#allocation3], 0
          %s132 = sshll.u32 %s0, 4
          %s133 = int_to_ptr.hbm [resolvable:$true] %s132
          %s134 = sshll.u32 [#allocation2], 4
          %s135 = int_to_ptr.vmem [resolvable:$true] %s134
          %140 = dma.hbm_to_vmem [thread:$0]  %s133, 256, %s135, [#allocation3], 64, 64, 4
        $region16: #{tpu_custom_call.1} parent=11 // pred_fallthru
          _
      $region12: #{tpu_custom_call.1} parent=5 // pred_fallthru
        _
      %p141 = scmp.lt.s32.totalorder %s13, 2
      // Predicated region
      $region17: #{tpu_custom_call.1} parent=5 // pred_check
        %p142 = pneg %p141
      $region18: #{tpu_custom_call.1} parent=5 // pred_check_branch
        %144 = sbr.rel (%p142) target = $region20
      $region19: #{tpu_custom_call.1} parent=5 // pred_region
        // Predicated region
        $region21: #{tpu_custom_call.1} parent=19 // pred_check
          %p145 = pneg %p54
        $region22: #{tpu_custom_call.1} parent=19 // pred_check_branch
          %147 = sbr.rel (%p145) target = $region24
        $region23: #{tpu_custom_call.1} parent=19 // pred_region
          %s148 = sand.u32 %s13, 1
          %s149 = scalar_lea.sflag [#allocation5], %s148
          %s150 = sand.u32 %s44, 1
          %s151 = smul.addr %s150, 128
          %s152 = scalar_lea.vmem [#allocation4], %s151
          %s153 = smul.u32 4, %s13
          %155 = vsyncadd %s149, 0
          %s156 = smul.addr %s153, 4
          %s157 = smul.addr %s156, 8
          %s158 = scalar_lea.hbm %s1, %s157
          %s159 = sshll.u32 %s158, 4
          %s160 = int_to_ptr.hbm [resolvable:$true] %s159
          %s161 = sshll.u32 %s152, 4
          %s162 = int_to_ptr.vmem [resolvable:$true] %s161
          %167 = dma.hbm_to_vmem [thread:$0]  %s160, 2048, %s162, %s149, 128, 128, 8
        $region24: #{tpu_custom_call.1} parent=19 // pred_fallthru
          _
        // Predicated region
        $region25: #{tpu_custom_call.1} parent=19 // pred_check
          %p168 = pneg %p80
        $region26: #{tpu_custom_call.1} parent=19 // pred_check_branch
          %170 = sbr.rel (%p168) target = $region28
        $region27: #{tpu_custom_call.1} parent=19 // pred_region
          %s171 = sand.u32 %s13, 1
          %s172 = scalar_lea.sflag [#allocation5], %s171
          %s173 = sand.u32 %s70, 1
          %s174 = smul.addr %s173, 128
          %s175 = scalar_lea.vmem [#allocation6], %s174
          %s176 = smul.u32 4, %s13
          %178 = vsyncadd %s172, 0
          %s179 = smul.addr %s176, 4
          %s180 = smul.addr %s179, 8
          %s181 = scalar_lea.hbm %s2, %s180
          %s182 = sshll.u32 %s181, 4
          %s183 = int_to_ptr.hbm [resolvable:$true] %s182
          %s184 = sshll.u32 %s175, 4
          %s185 = int_to_ptr.vmem [resolvable:$true] %s184
          %190 = dma.hbm_to_vmem [thread:$0]  %s183, 2048, %s185, %s172, 128, 128, 8
        $region28: #{tpu_custom_call.1} parent=19 // pred_fallthru
          _
      $region20: #{tpu_custom_call.1} parent=5 // pred_fallthru
        _
      %p191 = scmp.le.s32.totalorder 1, %s13
      %p192 = scmp.lt.s32.totalorder %s13, 3
      %p193 = pnand %p191, %p192
      %p194 = pneg %p193
      // Predicated region
      $region29: #{tpu_custom_call.1} parent=5 // pred_check
        _
      $region30: #{tpu_custom_call.1} parent=5 // pred_check_branch
        %196 = sbr.rel (%p193) target = $region32
      $region31: #{tpu_custom_call.1} parent=5 // pred_region
        %s197 = ssub.s32 %s13, 1
        // Predicated region
        $region33: #{tpu_custom_call.1} parent=31 // pred_check
          %p198 = pneg %p34
        $region34: #{tpu_custom_call.1} parent=31 // pred_check_branch
          %200 = sbr.rel (%p198) target = $region36
        $region35: #{tpu_custom_call.1} parent=31 // pred_region
          %202 = dma.done [#allocation3], 256
        $region36: #{tpu_custom_call.1} parent=31 // pred_fallthru
          _
        %s203 = sand.u32 %s18, 1
        %s204 = scalar_lea.sflag [#allocation5], %s203
        %s205 = sand.u32 %s47, 1
        %s206 = smul.addr %s205, 128
        %s207 = scalar_lea.vmem [#allocation4], %s206
        // Predicated region
        $region37: #{tpu_custom_call.1} parent=31 // pred_check
          %p208 = pneg %p60
        $region38: #{tpu_custom_call.1} parent=31 // pred_check_branch
          %210 = sbr.rel (%p208) target = $region40
        $region39: #{tpu_custom_call.1} parent=31 // pred_region
          %212 = dma.done %s204, 2048
        $region40: #{tpu_custom_call.1} parent=31 // pred_fallthru
          _
        %s213 = sand.u32 %s18, 1
        %s214 = scalar_lea.sflag [#allocation5], %s213
        %s215 = sand.u32 %s73, 1
        %s216 = smul.addr %s215, 128
        %s217 = scalar_lea.vmem [#allocation6], %s216
        // Predicated region
        $region41: #{tpu_custom_call.1} parent=31 // pred_check
          %p218 = pneg %p86
        $region42: #{tpu_custom_call.1} parent=31 // pred_check_branch
          %220 = sbr.rel (%p218) target = $region44
        $region43: #{tpu_custom_call.1} parent=31 // pred_region
          %222 = dma.done %s214, 2048
        $region44: #{tpu_custom_call.1} parent=31 // pred_fallthru
          _
        %p223 = pneg %p34
        %p224 = pneg %p31
        %s225 = sand.u32 %s18, 1
        %s226 = scalar_lea.sflag [#allocation5], %s225
        %s227 = sand.u32 %s47, 1
        %s228 = smul.addr %s227, 128
        %s229 = scalar_lea.vmem [#allocation4], %s228
        %p230 = pneg %p60
        %p231 = pneg %p57
        %s232 = sand.u32 %s18, 1
        %s233 = scalar_lea.sflag [#allocation5], %s232
        %s234 = sand.u32 %s73, 1
        %s235 = smul.addr %s234, 128
        %s236 = scalar_lea.vmem [#allocation6], %s235
        %p237 = pneg %p86
        %p238 = pneg %p83
        %p239 = pneg %p112
        %p240 = pneg %p109
        %p241 = scmp.lt.s32.totalorder %s18, 1
        %s242 = scalar_select %p241, %s18, 1
        %s243 = smul.addr %s242, 4
        %s244 = scalar_lea.vmem %s3, %s243
        %s245 = smul.u32 4, %s18
        %s246 = smul.u32 4, %s18
        %p247 = scmp.lt.s32.totalorder %s18, 1
        %s248 = scalar_select %p247, %s18, 1
        %s249 = smul.addr %s248, 4
        %s250 = scalar_lea.vmem %s3, %s249
        %v252 = vld [vmem:[%s207] sm:$0xff]
        %v253 = vld [vmem:[%s207 + $0x8] sm:$0xff]
        %v254 = vld [vmem:[%s207 + $0x10] sm:$0xff]
        %v255 = vld [vmem:[%s207 + $0x18] sm:$0xff]
        %v256 = vld [vmem:[%s207 + $0x20] sm:$0xff]
        %v257 = vld [vmem:[%s207 + $0x28] sm:$0xff]
        %v258 = vld [vmem:[%s207 + $0x30] sm:$0xff]
        %v259 = vld [vmem:[%s207 + $0x38] sm:$0xff]
        %v260 = vld [vmem:[%s207 + $0x40] sm:$0xff]
        %v261 = vld [vmem:[%s207 + $0x48] sm:$0xff]
        %v262 = vld [vmem:[%s207 + $0x50] sm:$0xff]
        %v263 = vld [vmem:[%s207 + $0x58] sm:$0xff]
        %v264 = vld [vmem:[%s207 + $0x60] sm:$0xff]
        %v265 = vld [vmem:[%s207 + $0x68] sm:$0xff]
        %v266 = vld [vmem:[%s207 + $0x70] sm:$0xff]
        %v267 = vld [vmem:[%s207 + $0x78] sm:$0xff]
        %v268 = vld [vmem:[%s217] sm:$0xff]
        %v269 = vld [vmem:[%s217 + $0x8] sm:$0xff]
        %v270 = vld [vmem:[%s217 + $0x10] sm:$0xff]
        %v271 = vld [vmem:[%s217 + $0x18] sm:$0xff]
        %v272 = vld [vmem:[%s217 + $0x20] sm:$0xff]
        %v273 = vld [vmem:[%s217 + $0x28] sm:$0xff]
        %v274 = vld [vmem:[%s217 + $0x30] sm:$0xff]
        %v275 = vld [vmem:[%s217 + $0x38] sm:$0xff]
        %v276 = vld [vmem:[%s217 + $0x40] sm:$0xff]
        %v277 = vld [vmem:[%s217 + $0x48] sm:$0xff]
        %v278 = vld [vmem:[%s217 + $0x50] sm:$0xff]
        %v279 = vld [vmem:[%s217 + $0x58] sm:$0xff]
        %v280 = vld [vmem:[%s217 + $0x60] sm:$0xff]
        %v281 = vld [vmem:[%s217 + $0x68] sm:$0xff]
        %v282 = vld [vmem:[%s217 + $0x70] sm:$0xff]
        %v283 = vld [vmem:[%s217 + $0x78] sm:$0xff]
        %v284 = vld [vmem:[#allocation2] sm:$0xf]
        %v285 = vld [vmem:[#allocation2 + $0x4] sm:$0xf]
        %v286 = vld [vmem:[#allocation2 + $0x8] sm:$0xf]
        %v287 = vld [vmem:[#allocation2 + $0xc] sm:$0xf]
        %v288 = vpack.c.bf16 %v269, %v268
        %v289 = vpack.c.bf16 %v271, %v270
        %v290 = vpack.c.bf16 %v273, %v272
        %v291 = vpack.c.bf16 %v275, %v274
        %v292 = vpack.c.bf16 %v277, %v276
        %v293 = vpack.c.bf16 %v279, %v278
        %v294 = vpack.c.bf16 %v281, %v280
        %v295 = vpack.c.bf16 %v283, %v282
        %v300 = vunpack.c.l.b16 %v284
        %v301 = vunpack.c.l.b16 %v285
        %v302 = vunpack.c.l.b16 %v286
        %v303 = vunpack.c.l.b16 %v287
        %v304 = vpack.c.b16 %v301, %v300
        %v305 = vpack.c.b16 %v303, %v302
        %vm308 = vcmask 261120
        %v310 = vsel %vm308, %v288, 0
        %v313 = vsel %vm308, %v289, 0
        %v316 = vsel %vm308, %v290, 0
        %v319 = vsel %vm308, %v291, 0
        %v322 = vsel %vm308, %v292, 0
        %v325 = vsel %vm308, %v293, 0
        %v328 = vsel %vm308, %v294, 0
        %v331 = vsel %vm308, %v295, 0
        %333 = vmatpush.bf16.msra.mxu0 0
        %334 = vmatpush.bf16.msra.mxu0 0
        %335 = vmatpush.bf16.msra.mxu0 0
        %336 = vmatpush.bf16.msra.mxu0 0
        %337 = vmatpush.bf16.msra.mxu0 0
        %338 = vmatpush.bf16.msra.mxu0 0
        %339 = vmatpush.bf16.msra.mxu0 %v305
        %340 = vmatpush.bf16.msra.mxu0 %v304
        %341 = vmatmul.bf16.gmra.mxu0 %v310
        %v342 = vpop.f32.mrf.mxu0
        %v343 = vadd.f32 0.0, %v342
        %v344 = vpop.f32.mrf.mxu0
        %v345 = vadd.f32 0.0, %v344
        %346 = vmatmul.bf16.gmra.mxu0 %v313
        %v347 = vpop.f32.mrf.mxu0
        %v348 = vadd.f32 0.0, %v347
        %v349 = vpop.f32.mrf.mxu0
        %v350 = vadd.f32 0.0, %v349
        %351 = vmatmul.bf16.gmra.mxu0 %v316
        %v352 = vpop.f32.mrf.mxu0
        %v353 = vadd.f32 0.0, %v352
        %v354 = vpop.f32.mrf.mxu0
        %v355 = vadd.f32 0.0, %v354
        %356 = vmatmul.bf16.gmra.mxu0 %v319
        %v357 = vpop.f32.mrf.mxu0
        %v358 = vadd.f32 0.0, %v357
        %v359 = vpop.f32.mrf.mxu0
        %v360 = vadd.f32 0.0, %v359
        %361 = vmatmul.bf16.gmra.mxu0 %v322
        %v362 = vpop.f32.mrf.mxu0
        %v363 = vadd.f32 0.0, %v362
        %v364 = vpop.f32.mrf.mxu0
        %v365 = vadd.f32 0.0, %v364
        %366 = vmatmul.bf16.gmra.mxu0 %v325
        %v367 = vpop.f32.mrf.mxu0
        %v368 = vadd.f32 0.0, %v367
        %v369 = vpop.f32.mrf.mxu0
        %v370 = vadd.f32 0.0, %v369
        %371 = vmatmul.bf16.gmra.mxu0 %v328
        %v372 = vpop.f32.mrf.mxu0
        %v373 = vadd.f32 0.0, %v372
        %v374 = vpop.f32.mrf.mxu0
        %v375 = vadd.f32 0.0, %v374
        %376 = vmatmul.bf16.gmra.mxu0 %v331
        %v377 = vpop.f32.mrf.mxu0
        %v378 = vadd.f32 0.0, %v377
        %v379 = vpop.f32.mrf.mxu0
        %v380 = vadd.f32 0.0, %v379
        %381 = vdwg.mxu0
        %v382 = vpack.c.bf16 %v343, %v343
        %v383 = vpack.c.bf16 %v345, %v345
        %v384 = vpack.c.bf16 %v348, %v348
        %v385 = vpack.c.bf16 %v350, %v350
        %v386 = vpack.c.bf16 %v353, %v353
        %v387 = vpack.c.bf16 %v355, %v355
        %v388 = vpack.c.bf16 %v358, %v358
        %v389 = vpack.c.bf16 %v360, %v360
        %v390 = vpack.c.bf16 %v363, %v363
        %v391 = vpack.c.bf16 %v365, %v365
        %v392 = vpack.c.bf16 %v368, %v368
        %v393 = vpack.c.bf16 %v370, %v370
        %v394 = vpack.c.bf16 %v373, %v373
        %v395 = vpack.c.bf16 %v375, %v375
        %v396 = vpack.c.bf16 %v378, %v378
        %v397 = vpack.c.bf16 %v380, %v380
        %v402 = vunpack.c.l.b16 %v382
        %v403 = vunpack.c.l.b16 %v383
        %v404 = vunpack.c.l.b16 %v384
        %v405 = vunpack.c.l.b16 %v385
        %v406 = vpack.c.b16 %v403, %v402
        %v407 = vpack.c.b16 %v405, %v404
        %v411 = vsel %vm308, %v304, 0
        %v414 = vsel %vm308, %v305, 0
        %416 = vmatpush.bf16.msra.mxu0 0
        %417 = vmatpush.bf16.msra.mxu0 0
        %418 = vmatpush.bf16.msra.mxu0 0
        %419 = vmatpush.bf16.msra.mxu0 0
        %420 = vmatpush.bf16.msra.mxu0 0
        %421 = vmatpush.bf16.msra.mxu0 0
        %422 = vmatpush.bf16.msra.mxu0 %v407
        %423 = vmatpush.bf16.msra.mxu0 %v406
        %424 = vmatmul.bf16.gmra.mxu0 %v411
        %v425 = vpop.f32.mrf.mxu0
        %v426 = vadd.f32 0.0, %v425
        %v427 = vpop.f32.mrf.mxu0
        %v428 = vadd.f32 0.0, %v427
        %429 = vmatmul.bf16.gmra.mxu0 %v414
        %v430 = vpop.f32.mrf.mxu0
        %v431 = vadd.f32 0.0, %v430
        %v432 = vpop.f32.mrf.mxu0
        %v433 = vadd.f32 0.0, %v432
        %434 = vdwg.mxu0
        %v439 = vunpack.c.l.b16 %v386
        %v440 = vunpack.c.l.b16 %v387
        %v441 = vunpack.c.l.b16 %v388
        %v442 = vunpack.c.l.b16 %v389
        %v443 = vpack.c.b16 %v440, %v439
        %v444 = vpack.c.b16 %v442, %v441
        %447 = vmatpush.bf16.msra.mxu0 0
        %448 = vmatpush.bf16.msra.mxu0 0
        %449 = vmatpush.bf16.msra.mxu0 0
        %450 = vmatpush.bf16.msra.mxu0 0
        %451 = vmatpush.bf16.msra.mxu0 0
        %452 = vmatpush.bf16.msra.mxu0 0
        %453 = vmatpush.bf16.msra.mxu0 %v444
        %454 = vmatpush.bf16.msra.mxu0 %v443
        %455 = vmatmul.bf16.gmra.mxu0 %v411
        %v456 = vpop.f32.mrf.mxu0
        %v457 = vadd.f32 0.0, %v456
        %v458 = vpop.f32.mrf.mxu0
        %v459 = vadd.f32 0.0, %v458
        %460 = vmatmul.bf16.gmra.mxu0 %v414
        %v461 = vpop.f32.mrf.mxu0
        %v462 = vadd.f32 0.0, %v461
        %v463 = vpop.f32.mrf.mxu0
        %v464 = vadd.f32 0.0, %v463
        %465 = vdwg.mxu0
        %v470 = vunpack.c.l.b16 %v390
        %v471 = vunpack.c.l.b16 %v391
        %v472 = vunpack.c.l.b16 %v392
        %v473 = vunpack.c.l.b16 %v393
        %v474 = vpack.c.b16 %v471, %v470
        %v475 = vpack.c.b16 %v473, %v472
        %478 = vmatpush.bf16.msra.mxu0 0
        %479 = vmatpush.bf16.msra.mxu0 0
        %480 = vmatpush.bf16.msra.mxu0 0
        %481 = vmatpush.bf16.msra.mxu0 0
        %482 = vmatpush.bf16.msra.mxu0 0
        %483 = vmatpush.bf16.msra.mxu0 0
        %484 = vmatpush.bf16.msra.mxu0 %v475
        %485 = vmatpush.bf16.msra.mxu0 %v474
        %486 = vmatmul.bf16.gmra.mxu0 %v411
        %v487 = vpop.f32.mrf.mxu0
        %v488 = vadd.f32 0.0, %v487
        %v489 = vpop.f32.mrf.mxu0
        %v490 = vadd.f32 0.0, %v489
        %491 = vmatmul.bf16.gmra.mxu0 %v414
        %v492 = vpop.f32.mrf.mxu0
        %v493 = vadd.f32 0.0, %v492
        %v494 = vpop.f32.mrf.mxu0
        %v495 = vadd.f32 0.0, %v494
        %496 = vdwg.mxu0
        %v501 = vunpack.c.l.b16 %v394
        %v502 = vunpack.c.l.b16 %v395
        %v503 = vunpack.c.l.b16 %v396
        %v504 = vunpack.c.l.b16 %v397
        %v505 = vpack.c.b16 %v502, %v501
        %v506 = vpack.c.b16 %v504, %v503
        %509 = vmatpush.bf16.msra.mxu0 0
        %510 = vmatpush.bf16.msra.mxu0 0
        %511 = vmatpush.bf16.msra.mxu0 0
        %512 = vmatpush.bf16.msra.mxu0 0
        %513 = vmatpush.bf16.msra.mxu0 0
        %514 = vmatpush.bf16.msra.mxu0 0
        %515 = vmatpush.bf16.msra.mxu0 %v506
        %516 = vmatpush.bf16.msra.mxu0 %v505
        %517 = vmatmul.bf16.gmra.mxu0 %v411
        %v518 = vpop.f32.mrf.mxu0
        %v519 = vadd.f32 0.0, %v518
        %v520 = vpop.f32.mrf.mxu0
        %v521 = vadd.f32 0.0, %v520
        %522 = vmatmul.bf16.gmra.mxu0 %v414
        %v523 = vpop.f32.mrf.mxu0
        %v524 = vadd.f32 0.0, %v523
        %v525 = vpop.f32.mrf.mxu0
        %v526 = vadd.f32 0.0, %v525
        %527 = vdwg.mxu0
        %v528 = vsub.f32 %v426, %v268
        %v529 = vsub.f32 %v428, %v269
        %v530 = vsub.f32 %v431, %v270
        %v531 = vsub.f32 %v433, %v271
        %v532 = vsub.f32 %v457, %v272
        %v533 = vsub.f32 %v459, %v273
        %v534 = vsub.f32 %v462, %v274
        %v535 = vsub.f32 %v464, %v275
        %v536 = vsub.f32 %v488, %v276
        %v537 = vsub.f32 %v490, %v277
        %v538 = vsub.f32 %v493, %v278
        %v539 = vsub.f32 %v495, %v279
        %v540 = vsub.f32 %v519, %v280
        %v541 = vsub.f32 %v521, %v281
        %v542 = vsub.f32 %v524, %v282
        %v543 = vsub.f32 %v526, %v283
        %v544 = vand.u32 2147483647, %v528
        %v545 = vand.u32 2147483647, %v529
        %v546 = vand.u32 2147483647, %v530
        %v547 = vand.u32 2147483647, %v531
        %v548 = vand.u32 2147483647, %v532
        %v549 = vand.u32 2147483647, %v533
        %v550 = vand.u32 2147483647, %v534
        %v551 = vand.u32 2147483647, %v535
        %v552 = vand.u32 2147483647, %v536
        %v553 = vand.u32 2147483647, %v537
        %v554 = vand.u32 2147483647, %v538
        %v555 = vand.u32 2147483647, %v539
        %v556 = vand.u32 2147483647, %v540
        %v557 = vand.u32 2147483647, %v541
        %v558 = vand.u32 2147483647, %v542
        %v559 = vand.u32 2147483647, %v543
        %v560 = vmul.f32 %v544, 5.0
        %v561 = vmul.f32 %v545, 5.0
        %v562 = vmul.f32 %v546, 5.0
        %v563 = vmul.f32 %v547, 5.0
        %v564 = vmul.f32 %v548, 5.0
        %v565 = vmul.f32 %v549, 5.0
        %v566 = vmul.f32 %v550, 5.0
        %v567 = vmul.f32 %v551, 5.0
        %v568 = vmul.f32 %v552, 5.0
        %v569 = vmul.f32 %v553, 5.0
        %v570 = vmul.f32 %v554, 5.0
        %v571 = vmul.f32 %v555, 5.0
        %v572 = vmul.f32 %v556, 5.0
        %v573 = vmul.f32 %v557, 5.0
        %v574 = vmul.f32 %v558, 5.0
        %v575 = vmul.f32 %v559, 5.0
        %v576 = vadd.f32 %v560, 1.0
        %v577 = vadd.f32 %v561, 1.0
        %v578 = vadd.f32 %v562, 1.0
        %v579 = vadd.f32 %v563, 1.0
        %v580 = vadd.f32 %v564, 1.0
        %v581 = vadd.f32 %v565, 1.0
        %v582 = vadd.f32 %v566, 1.0
        %v583 = vadd.f32 %v567, 1.0
        %v584 = vadd.f32 %v568, 1.0
        %v585 = vadd.f32 %v569, 1.0
        %v586 = vadd.f32 %v570, 1.0
        %v587 = vadd.f32 %v571, 1.0
        %v588 = vadd.f32 %v572, 1.0
        %v589 = vadd.f32 %v573, 1.0
        %v590 = vadd.f32 %v574, 1.0
        %v591 = vadd.f32 %v575, 1.0
        %v592 = vand.u32 2147483647, %v252
        %v593 = vand.u32 2147483647, %v253
        %v594 = vand.u32 2147483647, %v254
        %v595 = vand.u32 2147483647, %v255
        %v596 = vand.u32 2147483647, %v256
        %v597 = vand.u32 2147483647, %v257
        %v598 = vand.u32 2147483647, %v258
        %v599 = vand.u32 2147483647, %v259
        %v600 = vand.u32 2147483647, %v260
        %v601 = vand.u32 2147483647, %v261
        %v602 = vand.u32 2147483647, %v262
        %v603 = vand.u32 2147483647, %v263
        %v604 = vand.u32 2147483647, %v264
        %v605 = vand.u32 2147483647, %v265
        %v606 = vand.u32 2147483647, %v266
        %v607 = vand.u32 2147483647, %v267
        %v608 = vsub.f32 0.0, %v592
        %v609 = vsub.f32 0.0, %v593
        %v610 = vsub.f32 0.0, %v594
        %v611 = vsub.f32 0.0, %v595
        %v612 = vsub.f32 0.0, %v596
        %v613 = vsub.f32 0.0, %v597
        %v614 = vsub.f32 0.0, %v598
        %v615 = vsub.f32 0.0, %v599
        %v616 = vsub.f32 0.0, %v600
        %v617 = vsub.f32 0.0, %v601
        %v618 = vsub.f32 0.0, %v602
        %v619 = vsub.f32 0.0, %v603
        %v620 = vsub.f32 0.0, %v604
        %v621 = vsub.f32 0.0, %v605
        %v622 = vsub.f32 0.0, %v606
        %v623 = vsub.f32 0.0, %v607
        %v624 = vmul.f32 %v608, 1.442695
        %v625 = vpow.pop %v624
        %v626 = vmul.f32 %v609, 1.442695
        %v627 = vpow.pop %v626
        %v628 = vmul.f32 %v610, 1.442695
        %v629 = vpow.pop %v628
        %v630 = vmul.f32 %v611, 1.442695
        %v631 = vpow.pop %v630
        %v632 = vmul.f32 %v612, 1.442695
        %v633 = vpow.pop %v632
        %v634 = vmul.f32 %v613, 1.442695
        %v635 = vpow.pop %v634
        %v636 = vmul.f32 %v614, 1.442695
        %v637 = vpow.pop %v636
        %v638 = vmul.f32 %v615, 1.442695
        %v639 = vpow.pop %v638
        %v640 = vmul.f32 %v616, 1.442695
        %v641 = vpow.pop %v640
        %v642 = vmul.f32 %v617, 1.442695
        %v643 = vpow.pop %v642
        %v644 = vmul.f32 %v618, 1.442695
        %v645 = vpow.pop %v644
        %v646 = vmul.f32 %v619, 1.442695
        %v647 = vpow.pop %v646
        %v648 = vmul.f32 %v620, 1.442695
        %v649 = vpow.pop %v648
        %v650 = vmul.f32 %v621, 1.442695
        %v651 = vpow.pop %v650
        %v652 = vmul.f32 %v622, 1.442695
        %v653 = vpow.pop %v652
        %v654 = vmul.f32 %v623, 1.442695
        %v655 = vpow.pop %v654
        %v656 = vmax.f32 %v252, 0.0
        %v657 = vmax.f32 %v253, 0.0
        %v658 = vmax.f32 %v254, 0.0
        %v659 = vmax.f32 %v255, 0.0
        %v660 = vmax.f32 %v256, 0.0
        %v661 = vmax.f32 %v257, 0.0
        %v662 = vmax.f32 %v258, 0.0
        %v663 = vmax.f32 %v259, 0.0
        %v664 = vmax.f32 %v260, 0.0
        %v665 = vmax.f32 %v261, 0.0
        %v666 = vmax.f32 %v262, 0.0
        %v667 = vmax.f32 %v263, 0.0
        %v668 = vmax.f32 %v264, 0.0
        %v669 = vmax.f32 %v265, 0.0
        %v670 = vmax.f32 %v266, 0.0
        %v671 = vmax.f32 %v267, 0.0
        %v672 = vmul.f32 %v252, %v268
        %v673 = vmul.f32 %v253, %v269
        %v674 = vmul.f32 %v254, %v270
        %v675 = vmul.f32 %v255, %v271
        %v676 = vmul.f32 %v256, %v272
        %v677 = vmul.f32 %v257, %v273
        %v678 = vmul.f32 %v258, %v274
        %v679 = vmul.f32 %v259, %v275
        %v680 = vmul.f32 %v260, %v276
        %v681 = vmul.f32 %v261, %v277
        %v682 = vmul.f32 %v262, %v278
        %v683 = vmul.f32 %v263, %v279
        %v684 = vmul.f32 %v264, %v280
        %v685 = vmul.f32 %v265, %v281
        %v686 = vmul.f32 %v266, %v282
        %v687 = vmul.f32 %v267, %v283
        %v688 = vsub.f32 %v656, %v672
        %v689 = vsub.f32 %v657, %v673
        %v690 = vsub.f32 %v658, %v674
        %v691 = vsub.f32 %v659, %v675
        %v692 = vsub.f32 %v660, %v676
        %v693 = vsub.f32 %v661, %v677
        %v694 = vsub.f32 %v662, %v678
        %v695 = vsub.f32 %v663, %v679
        %v696 = vsub.f32 %v664, %v680
        %v697 = vsub.f32 %v665, %v681
        %v698 = vsub.f32 %v666, %v682
        %v699 = vsub.f32 %v667, %v683
        %v700 = vsub.f32 %v668, %v684
        %v701 = vsub.f32 %v669, %v685
        %v702 = vsub.f32 %v670, %v686
        %v703 = vsub.f32 %v671, %v687
        %v704 = vadd.f32 %v625, 1.0
        %v705 = vlog2.pop %v704
        %v706 = vmul.f32 %v705, 0.6931472
        %v707 = vmul.f32 -0.5, %v625
        %v708 = vadd.f32 %v707, 1.0
        %v709 = vmul.f32 %v708, %v625
        %v710 = vand.u32 2147483647, %v625
        %vm711 = vcmp.lt.f32.partialorder %v710, 0.0004427343
        %v712 = vsel %vm711, %v709, %v706
        %v713 = vadd.f32 %v627, 1.0
        %v714 = vlog2.pop %v713
        %v715 = vmul.f32 %v714, 0.6931472
        %v716 = vmul.f32 -0.5, %v627
        %v717 = vadd.f32 %v716, 1.0
        %v718 = vmul.f32 %v717, %v627
        %v719 = vand.u32 2147483647, %v627
        %vm720 = vcmp.lt.f32.partialorder %v719, 0.0004427343
        %v721 = vsel %vm720, %v718, %v715
        %v722 = vadd.f32 %v629, 1.0
        %v723 = vlog2.pop %v722
        %v724 = vmul.f32 %v723, 0.6931472
        %v725 = vmul.f32 -0.5, %v629
        %v726 = vadd.f32 %v725, 1.0
        %v727 = vmul.f32 %v726, %v629
        %v728 = vand.u32 2147483647, %v629
        %vm729 = vcmp.lt.f32.partialorder %v728, 0.0004427343
        %v730 = vsel %vm729, %v727, %v724
        %v731 = vadd.f32 %v631, 1.0
        %v732 = vlog2.pop %v731
        %v733 = vmul.f32 %v732, 0.6931472
        %v734 = vmul.f32 -0.5, %v631
        %v735 = vadd.f32 %v734, 1.0
        %v736 = vmul.f32 %v735, %v631
        %v737 = vand.u32 2147483647, %v631
        %vm738 = vcmp.lt.f32.partialorder %v737, 0.0004427343
        %v739 = vsel %vm738, %v736, %v733
        %v740 = vadd.f32 %v633, 1.0
        %v741 = vlog2.pop %v740
        %v742 = vmul.f32 %v741, 0.6931472
        %v743 = vmul.f32 -0.5, %v633
        %v744 = vadd.f32 %v743, 1.0
        %v745 = vmul.f32 %v744, %v633
        %v746 = vand.u32 2147483647, %v633
        %vm747 = vcmp.lt.f32.partialorder %v746, 0.0004427343
        %v748 = vsel %vm747, %v745, %v742
        %v749 = vadd.f32 %v635, 1.0
        %v750 = vlog2.pop %v749
        %v751 = vmul.f32 %v750, 0.6931472
        %v752 = vmul.f32 -0.5, %v635
        %v753 = vadd.f32 %v752, 1.0
        %v754 = vmul.f32 %v753, %v635
        %v755 = vand.u32 2147483647, %v635
        %vm756 = vcmp.lt.f32.partialorder %v755, 0.0004427343
        %v757 = vsel %vm756, %v754, %v751
        %v758 = vadd.f32 %v637, 1.0
        %v759 = vlog2.pop %v758
        %v760 = vmul.f32 %v759, 0.6931472
        %v761 = vmul.f32 -0.5, %v637
        %v762 = vadd.f32 %v761, 1.0
        %v763 = vmul.f32 %v762, %v637
        %v764 = vand.u32 2147483647, %v637
        %vm765 = vcmp.lt.f32.partialorder %v764, 0.0004427343
        %v766 = vsel %vm765, %v763, %v760
        %v767 = vadd.f32 %v639, 1.0
        %v768 = vlog2.pop %v767
        %v769 = vmul.f32 %v768, 0.6931472
        %v770 = vmul.f32 -0.5, %v639
        %v771 = vadd.f32 %v770, 1.0
        %v772 = vmul.f32 %v771, %v639
        %v773 = vand.u32 2147483647, %v639
        %vm774 = vcmp.lt.f32.partialorder %v773, 0.0004427343
        %v775 = vsel %vm774, %v772, %v769
        %v776 = vadd.f32 %v641, 1.0
        %v777 = vlog2.pop %v776
        %v778 = vmul.f32 %v777, 0.6931472
        %v779 = vmul.f32 -0.5, %v641
        %v780 = vadd.f32 %v779, 1.0
        %v781 = vmul.f32 %v780, %v641
        %v782 = vand.u32 2147483647, %v641
        %vm783 = vcmp.lt.f32.partialorder %v782, 0.0004427343
        %v784 = vsel %vm783, %v781, %v778
        %v785 = vadd.f32 %v643, 1.0
        %v786 = vlog2.pop %v785
        %v787 = vmul.f32 %v786, 0.6931472
        %v788 = vmul.f32 -0.5, %v643
        %v789 = vadd.f32 %v788, 1.0
        %v790 = vmul.f32 %v789, %v643
        %v791 = vand.u32 2147483647, %v643
        %vm792 = vcmp.lt.f32.partialorder %v791, 0.0004427343
        %v793 = vsel %vm792, %v790, %v787
        %v794 = vadd.f32 %v645, 1.0
        %v795 = vlog2.pop %v794
        %v796 = vmul.f32 %v795, 0.6931472
        %v797 = vmul.f32 -0.5, %v645
        %v798 = vadd.f32 %v797, 1.0
        %v799 = vmul.f32 %v798, %v645
        %v800 = vand.u32 2147483647, %v645
        %vm801 = vcmp.lt.f32.partialorder %v800, 0.0004427343
        %v802 = vsel %vm801, %v799, %v796
        %v803 = vadd.f32 %v647, 1.0
        %v804 = vlog2.pop %v803
        %v805 = vmul.f32 %v804, 0.6931472
        %v806 = vmul.f32 -0.5, %v647
        %v807 = vadd.f32 %v806, 1.0
        %v808 = vmul.f32 %v807, %v647
        %v809 = vand.u32 2147483647, %v647
        %vm810 = vcmp.lt.f32.partialorder %v809, 0.0004427343
        %v811 = vsel %vm810, %v808, %v805
        %v812 = vadd.f32 %v649, 1.0
        %v813 = vlog2.pop %v812
        %v814 = vmul.f32 %v813, 0.6931472
        %v815 = vmul.f32 -0.5, %v649
        %v816 = vadd.f32 %v815, 1.0
        %v817 = vmul.f32 %v816, %v649
        %v818 = vand.u32 2147483647, %v649
        %vm819 = vcmp.lt.f32.partialorder %v818, 0.0004427343
        %v820 = vsel %vm819, %v817, %v814
        %v821 = vadd.f32 %v651, 1.0
        %v822 = vlog2.pop %v821
        %v823 = vmul.f32 %v822, 0.6931472
        %v824 = vmul.f32 -0.5, %v651
        %v825 = vadd.f32 %v824, 1.0
        %v826 = vmul.f32 %v825, %v651
        %v827 = vand.u32 2147483647, %v651
        %vm828 = vcmp.lt.f32.partialorder %v827, 0.0004427343
        %v829 = vsel %vm828, %v826, %v823
        %v830 = vadd.f32 %v653, 1.0
        %v831 = vlog2.pop %v830
        %v832 = vmul.f32 %v831, 0.6931472
        %v833 = vmul.f32 -0.5, %v653
        %v834 = vadd.f32 %v833, 1.0
        %v835 = vmul.f32 %v834, %v653
        %v836 = vand.u32 2147483647, %v653
        %vm837 = vcmp.lt.f32.partialorder %v836, 0.0004427343
        %v838 = vsel %vm837, %v835, %v832
        %v839 = vadd.f32 %v655, 1.0
        %v840 = vlog2.pop %v839
        %v841 = vmul.f32 %v840, 0.6931472
        %v842 = vmul.f32 -0.5, %v655
        %v843 = vadd.f32 %v842, 1.0
        %v844 = vmul.f32 %v843, %v655
        %v845 = vand.u32 2147483647, %v655
        %vm846 = vcmp.lt.f32.partialorder %v845, 0.0004427343
        %v847 = vsel %vm846, %v844, %v841
        %v848 = vadd.f32 %v688, %v712
        %v849 = vadd.f32 %v689, %v721
        %v850 = vadd.f32 %v690, %v730
        %v851 = vadd.f32 %v691, %v739
        %v852 = vadd.f32 %v692, %v748
        %v853 = vadd.f32 %v693, %v757
        %v854 = vadd.f32 %v694, %v766
        %v855 = vadd.f32 %v695, %v775
        %v856 = vadd.f32 %v696, %v784
        %v857 = vadd.f32 %v697, %v793
        %v858 = vadd.f32 %v698, %v802
        %v859 = vadd.f32 %v699, %v811
        %v860 = vadd.f32 %v700, %v820
        %v861 = vadd.f32 %v701, %v829
        %v862 = vadd.f32 %v702, %v838
        %v863 = vadd.f32 %v703, %v847
        %v864 = vadd.f32 %v625, 1.0
        %v865 = vadd.f32 %v627, 1.0
        %v866 = vadd.f32 %v629, 1.0
        %v867 = vadd.f32 %v631, 1.0
        %v868 = vadd.f32 %v633, 1.0
        %v869 = vadd.f32 %v635, 1.0
        %v870 = vadd.f32 %v637, 1.0
        %v871 = vadd.f32 %v639, 1.0
        %v872 = vadd.f32 %v641, 1.0
        %v873 = vadd.f32 %v643, 1.0
        %v874 = vadd.f32 %v645, 1.0
        %v875 = vadd.f32 %v647, 1.0
        %v876 = vadd.f32 %v649, 1.0
        %v877 = vadd.f32 %v651, 1.0
        %v878 = vadd.f32 %v653, 1.0
        %v879 = vadd.f32 %v655, 1.0
        %v880 = vrcp.pop %v864
        %v881 = vrcp.pop %v865
        %v882 = vrcp.pop %v866
        %v883 = vrcp.pop %v867
        %v884 = vrcp.pop %v868
        %v885 = vrcp.pop %v869
        %v886 = vrcp.pop %v870
        %v887 = vrcp.pop %v871
        %v888 = vrcp.pop %v872
        %v889 = vrcp.pop %v873
        %v890 = vrcp.pop %v874
        %v891 = vrcp.pop %v875
        %v892 = vrcp.pop %v876
        %v893 = vrcp.pop %v877
        %v894 = vrcp.pop %v878
        %v895 = vrcp.pop %v879
        %vm896 = vcmp.ge.f32.partialorder %v252, 0.0
        %vm897 = vcmp.ge.f32.partialorder %v253, 0.0
        %vm898 = vcmp.ge.f32.partialorder %v254, 0.0
        %vm899 = vcmp.ge.f32.partialorder %v255, 0.0
        %vm900 = vcmp.ge.f32.partialorder %v256, 0.0
        %vm901 = vcmp.ge.f32.partialorder %v257, 0.0
        %vm902 = vcmp.ge.f32.partialorder %v258, 0.0
        %vm903 = vcmp.ge.f32.partialorder %v259, 0.0
        %vm904 = vcmp.ge.f32.partialorder %v260, 0.0
        %vm905 = vcmp.ge.f32.partialorder %v261, 0.0
        %vm906 = vcmp.ge.f32.partialorder %v262, 0.0
        %vm907 = vcmp.ge.f32.partialorder %v263, 0.0
        %vm908 = vcmp.ge.f32.partialorder %v264, 0.0
        %vm909 = vcmp.ge.f32.partialorder %v265, 0.0
        %vm910 = vcmp.ge.f32.partialorder %v266, 0.0
        %vm911 = vcmp.ge.f32.partialorder %v267, 0.0
        %v912 = vmul.f32 %v625, %v880
        %v913 = vmul.f32 %v627, %v881
        %v914 = vmul.f32 %v629, %v882
        %v915 = vmul.f32 %v631, %v883
        %v916 = vmul.f32 %v633, %v884
        %v917 = vmul.f32 %v635, %v885
        %v918 = vmul.f32 %v637, %v886
        %v919 = vmul.f32 %v639, %v887
        %v920 = vmul.f32 %v641, %v888
        %v921 = vmul.f32 %v643, %v889
        %v922 = vmul.f32 %v645, %v890
        %v923 = vmul.f32 %v647, %v891
        %v924 = vmul.f32 %v649, %v892
        %v925 = vmul.f32 %v651, %v893
        %v926 = vmul.f32 %v653, %v894
        %v927 = vmul.f32 %v655, %v895
        %v928 = vsel %vm896, %v880, %v912
        %v929 = vsel %vm897, %v881, %v913
        %v930 = vsel %vm898, %v882, %v914
        %v931 = vsel %vm899, %v883, %v915
        %v932 = vsel %vm900, %v884, %v916
        %v933 = vsel %vm901, %v885, %v917
        %v934 = vsel %vm902, %v886, %v918
        %v935 = vsel %vm903, %v887, %v919
        %v936 = vsel %vm904, %v888, %v920
        %v937 = vsel %vm905, %v889, %v921
        %v938 = vsel %vm906, %v890, %v922
        %v939 = vsel %vm907, %v891, %v923
        %v940 = vsel %vm908, %v892, %v924
        %v941 = vsel %vm909, %v893, %v925
        %v942 = vsel %vm910, %v894, %v926
        %v943 = vsel %vm911, %v895, %v927
        %v944 = vsel %vm308, %v848, 0.0
        %945 = vadd.xlane.f32.xlu0 %v944
        %v946 = vpop.xlane.xlu0 %945
        %v947 = vsel %vm308, %v849, 0.0
        %948 = vadd.xlane.f32.xlu0 %v947
        %v949 = vpop.xlane.xlu0 %948
        %v950 = vsel %vm308, %v850, 0.0
        %951 = vadd.xlane.f32.xlu0 %v950
        %v952 = vpop.xlane.xlu0 %951
        %v953 = vsel %vm308, %v851, 0.0
        %954 = vadd.xlane.f32.xlu0 %v953
        %v955 = vpop.xlane.xlu0 %954
        %v956 = vsel %vm308, %v852, 0.0
        %957 = vadd.xlane.f32.xlu0 %v956
        %v958 = vpop.xlane.xlu0 %957
        %v959 = vsel %vm308, %v853, 0.0
        %960 = vadd.xlane.f32.xlu0 %v959
        %v961 = vpop.xlane.xlu0 %960
        %v962 = vsel %vm308, %v854, 0.0
        %963 = vadd.xlane.f32.xlu0 %v962
        %v964 = vpop.xlane.xlu0 %963
        %v965 = vsel %vm308, %v855, 0.0
        %966 = vadd.xlane.f32.xlu0 %v965
        %v967 = vpop.xlane.xlu0 %966
        %v968 = vsel %vm308, %v856, 0.0
        %969 = vadd.xlane.f32.xlu0 %v968
        %v970 = vpop.xlane.xlu0 %969
        %v971 = vsel %vm308, %v857, 0.0
        %972 = vadd.xlane.f32.xlu0 %v971
        %v973 = vpop.xlane.xlu0 %972
        %v974 = vsel %vm308, %v858, 0.0
        %975 = vadd.xlane.f32.xlu0 %v974
        %v976 = vpop.xlane.xlu0 %975
        %v977 = vsel %vm308, %v859, 0.0
        %978 = vadd.xlane.f32.xlu0 %v977
        %v979 = vpop.xlane.xlu0 %978
        %v980 = vsel %vm308, %v860, 0.0
        %981 = vadd.xlane.f32.xlu0 %v980
        %v982 = vpop.xlane.xlu0 %981
        %v983 = vsel %vm308, %v861, 0.0
        %984 = vadd.xlane.f32.xlu0 %v983
        %v985 = vpop.xlane.xlu0 %984
        %v986 = vsel %vm308, %v862, 0.0
        %987 = vadd.xlane.f32.xlu0 %v986
        %v988 = vpop.xlane.xlu0 %987
        %v989 = vsel %vm308, %v863, 0.0
        %990 = vadd.xlane.f32.xlu0 %v989
        %v991 = vpop.xlane.xlu0 %990
        %v1008 = vlaneseq
        %v1009 = vand.u32 %v1008, 127
        %v1010 = vperm.slane %v946, %v1009
        %v1011 = vadd.s32 %v1009, 4294967288
        %v1012 = vperm.slane %v949, %v1011
        %vm1013 = vcmask 130112
        %v1014 = vsel %vm1013, %v1012, %v1010
        %v1015 = vadd.s32 %v1009, 4294967280
        %v1016 = vperm.slane %v952, %v1015
        %vm1017 = vcmask 195712
        %v1018 = vsel %vm1017, %v1016, %v1014
        %v1019 = vadd.s32 %v1009, 4294967272
        %v1020 = vperm.slane %v955, %v1019
        %vm1021 = vcmask 261312
        %v1022 = vsel %vm1021, %v1020, %v1018
        %v1023 = vperm.slane %v958, %v1009
        %v1024 = vperm.slane %v961, %v1011
        %v1025 = vsel %vm1013, %v1024, %v1023
        %v1026 = vperm.slane %v964, %v1015
        %v1027 = vsel %vm1017, %v1026, %v1025
        %v1028 = vperm.slane %v967, %v1019
        %v1029 = vsel %vm1021, %v1028, %v1027
        %v1030 = vperm.slane %v970, %v1009
        %v1031 = vperm.slane %v973, %v1011
        %v1032 = vsel %vm1013, %v1031, %v1030
        %v1033 = vperm.slane %v976, %v1015
        %v1034 = vsel %vm1017, %v1033, %v1032
        %v1035 = vperm.slane %v979, %v1019
        %v1036 = vsel %vm1021, %v1035, %v1034
        %v1037 = vperm.slane %v982, %v1009
        %v1038 = vperm.slane %v985, %v1011
        %v1039 = vsel %vm1013, %v1038, %v1037
        %v1040 = vperm.slane %v988, %v1015
        %v1041 = vsel %vm1017, %v1040, %v1039
        %v1042 = vperm.slane %v991, %v1019
        %v1043 = vsel %vm1021, %v1042, %v1041
        %vm1044 = vcmask 1041409
        %v1045 = vsel %vm1044, %v1029, %v1022
        %vm1046 = vcmask 1042434
        %v1047 = vsel %vm1046, %v1036, %v1045
        %vm1048 = vcmask 1043459
        %v1049 = vsel %vm1048, %v1043, %v1047
        %vm1051 = vcmask 257024
        %v1052 = vsel %vm1051, %v1049, 0.0
        %1053 = vadd.xlane.f32.xlu0 %v1052
        %v1054 = vpop.xlane.xlu0 %1053
        %vm1055 = vcmask 3072
        %1056 = vst.msk [vmem:[%s250] sm:$0xf] %vm1055, %v1054
        %v1057 = vmul.f32 %v928, %v268
        %v1058 = vmul.f32 %v929, %v269
        %v1059 = vmul.f32 %v930, %v270
        %v1060 = vmul.f32 %v931, %v271
        %v1061 = vmul.f32 %v932, %v272
        %v1062 = vmul.f32 %v933, %v273
        %v1063 = vmul.f32 %v934, %v274
        %v1064 = vmul.f32 %v935, %v275
        %v1065 = vmul.f32 %v936, %v276
        %v1066 = vmul.f32 %v937, %v277
        %v1067 = vmul.f32 %v938, %v278
        %v1068 = vmul.f32 %v939, %v279
        %v1069 = vmul.f32 %v940, %v280
        %v1070 = vmul.f32 %v941, %v281
        %v1071 = vmul.f32 %v942, %v282
        %v1072 = vmul.f32 %v943, %v283
        %v1073 = vmul.f32 %v1057, %v576
        %v1074 = vmul.f32 %v1058, %v577
        %v1075 = vmul.f32 %v1059, %v578
        %v1076 = vmul.f32 %v1060, %v579
        %v1077 = vmul.f32 %v1061, %v580
        %v1078 = vmul.f32 %v1062, %v581
        %v1079 = vmul.f32 %v1063, %v582
        %v1080 = vmul.f32 %v1064, %v583
        %v1081 = vmul.f32 %v1065, %v584
        %v1082 = vmul.f32 %v1066, %v585
        %v1083 = vmul.f32 %v1067, %v586
        %v1084 = vmul.f32 %v1068, %v587
        %v1085 = vmul.f32 %v1069, %v588
        %v1086 = vmul.f32 %v1070, %v589
        %v1087 = vmul.f32 %v1071, %v590
        %v1088 = vmul.f32 %v1072, %v591
        %v1089 = vsel %vm308, %v1073, 0.0
        %1090 = vadd.xlane.f32.xlu0 %v1089
        %v1091 = vpop.xlane.xlu0 %1090
        %v1092 = vsel %vm308, %v1074, 0.0
        %1093 = vadd.xlane.f32.xlu0 %v1092
        %v1094 = vpop.xlane.xlu0 %1093
        %v1095 = vsel %vm308, %v1075, 0.0
        %1096 = vadd.xlane.f32.xlu0 %v1095
        %v1097 = vpop.xlane.xlu0 %1096
        %v1098 = vsel %vm308, %v1076, 0.0
        %1099 = vadd.xlane.f32.xlu0 %v1098
        %v1100 = vpop.xlane.xlu0 %1099
        %v1101 = vsel %vm308, %v1077, 0.0
        %1102 = vadd.xlane.f32.xlu0 %v1101
        %v1103 = vpop.xlane.xlu0 %1102
        %v1104 = vsel %vm308, %v1078, 0.0
        %1105 = vadd.xlane.f32.xlu0 %v1104
        %v1106 = vpop.xlane.xlu0 %1105
        %v1107 = vsel %vm308, %v1079, 0.0
        %1108 = vadd.xlane.f32.xlu0 %v1107
        %v1109 = vpop.xlane.xlu0 %1108
        %v1110 = vsel %vm308, %v1080, 0.0
        %1111 = vadd.xlane.f32.xlu0 %v1110
        %v1112 = vpop.xlane.xlu0 %1111
        %v1113 = vsel %vm308, %v1081, 0.0
        %1114 = vadd.xlane.f32.xlu0 %v1113
        %v1115 = vpop.xlane.xlu0 %1114
        %v1116 = vsel %vm308, %v1082, 0.0
        %1117 = vadd.xlane.f32.xlu0 %v1116
        %v1118 = vpop.xlane.xlu0 %1117
        %v1119 = vsel %vm308, %v1083, 0.0
        %1120 = vadd.xlane.f32.xlu0 %v1119
        %v1121 = vpop.xlane.xlu0 %1120
        %v1122 = vsel %vm308, %v1084, 0.0
        %1123 = vadd.xlane.f32.xlu0 %v1122
        %v1124 = vpop.xlane.xlu0 %1123
        %v1125 = vsel %vm308, %v1085, 0.0
        %1126 = vadd.xlane.f32.xlu0 %v1125
        %v1127 = vpop.xlane.xlu0 %1126
        %v1128 = vsel %vm308, %v1086, 0.0
        %1129 = vadd.xlane.f32.xlu0 %v1128
        %v1130 = vpop.xlane.xlu0 %1129
        %v1131 = vsel %vm308, %v1087, 0.0
        %1132 = vadd.xlane.f32.xlu0 %v1131
        %v1133 = vpop.xlane.xlu0 %1132
        %v1134 = vsel %vm308, %v1088, 0.0
        %1135 = vadd.xlane.f32.xlu0 %v1134
        %v1136 = vpop.xlane.xlu0 %1135
        %v1153 = vperm.slane %v1091, %v1009
        %v1154 = vperm.slane %v1094, %v1011
        %v1155 = vsel %vm1013, %v1154, %v1153
        %v1156 = vperm.slane %v1097, %v1015
        %v1157 = vsel %vm1017, %v1156, %v1155
        %v1158 = vperm.slane %v1100, %v1019
        %v1159 = vsel %vm1021, %v1158, %v1157
        %v1160 = vperm.slane %v1103, %v1009
        %v1161 = vperm.slane %v1106, %v1011
        %v1162 = vsel %vm1013, %v1161, %v1160
        %v1163 = vperm.slane %v1109, %v1015
        %v1164 = vsel %vm1017, %v1163, %v1162
        %v1165 = vperm.slane %v1112, %v1019
        %v1166 = vsel %vm1021, %v1165, %v1164
        %v1167 = vperm.slane %v1115, %v1009
        %v1168 = vperm.slane %v1118, %v1011
        %v1169 = vsel %vm1013, %v1168, %v1167
        %v1170 = vperm.slane %v1121, %v1015
        %v1171 = vsel %vm1017, %v1170, %v1169
        %v1172 = vperm.slane %v1124, %v1019
        %v1173 = vsel %vm1021, %v1172, %v1171
        %v1174 = vperm.slane %v1127, %v1009
        %v1175 = vperm.slane %v1130, %v1011
        %v1176 = vsel %vm1013, %v1175, %v1174
        %v1177 = vperm.slane %v1133, %v1015
        %v1178 = vsel %vm1017, %v1177, %v1176
        %v1179 = vperm.slane %v1136, %v1019
        %v1180 = vsel %vm1021, %v1179, %v1178
        %v1181 = vsel %vm1044, %v1166, %v1159
        %v1182 = vsel %vm1046, %v1173, %v1181
        %v1183 = vsel %vm1048, %v1180, %v1182
        %v1185 = vsel %vm1051, %v1183, 0.0
        %1186 = vadd.xlane.f32.xlu0 %v1185
        %v1187 = vpop.xlane.xlu0 %1186
        %vm1188 = vcmask 11272
        %1189 = vst.msk [vmem:[%s250] sm:$0xf] %vm1188, %v1187
        %v1190 = vadd.f32 %v928, %v268
        %v1191 = vadd.f32 %v929, %v269
        %v1192 = vadd.f32 %v930, %v270
        %v1193 = vadd.f32 %v931, %v271
        %v1194 = vadd.f32 %v932, %v272
        %v1195 = vadd.f32 %v933, %v273
        %v1196 = vadd.f32 %v934, %v274
        %v1197 = vadd.f32 %v935, %v275
        %v1198 = vadd.f32 %v936, %v276
        %v1199 = vadd.f32 %v937, %v277
        %v1200 = vadd.f32 %v938, %v278
        %v1201 = vadd.f32 %v939, %v279
        %v1202 = vadd.f32 %v940, %v280
        %v1203 = vadd.f32 %v941, %v281
        %v1204 = vadd.f32 %v942, %v282
        %v1205 = vadd.f32 %v943, %v283
        %v1206 = vmul.f32 %v1190, %v576
        %v1207 = vmul.f32 %v1191, %v577
        %v1208 = vmul.f32 %v1192, %v578
        %v1209 = vmul.f32 %v1193, %v579
        %v1210 = vmul.f32 %v1194, %v580
        %v1211 = vmul.f32 %v1195, %v581
        %v1212 = vmul.f32 %v1196, %v582
        %v1213 = vmul.f32 %v1197, %v583
        %v1214 = vmul.f32 %v1198, %v584
        %v1215 = vmul.f32 %v1199, %v585
        %v1216 = vmul.f32 %v1200, %v586
        %v1217 = vmul.f32 %v1201, %v587
        %v1218 = vmul.f32 %v1202, %v588
        %v1219 = vmul.f32 %v1203, %v589
        %v1220 = vmul.f32 %v1204, %v590
        %v1221 = vmul.f32 %v1205, %v591
        %v1222 = vsel %vm308, %v1206, 0.0
        %1223 = vadd.xlane.f32.xlu0 %v1222
        %v1224 = vpop.xlane.xlu0 %1223
        %v1225 = vsel %vm308, %v1207, 0.0
        %1226 = vadd.xlane.f32.xlu0 %v1225
        %v1227 = vpop.xlane.xlu0 %1226
        %v1228 = vsel %vm308, %v1208, 0.0
        %1229 = vadd.xlane.f32.xlu0 %v1228
        %v1230 = vpop.xlane.xlu0 %1229
        %v1231 = vsel %vm308, %v1209, 0.0
        %1232 = vadd.xlane.f32.xlu0 %v1231
        %v1233 = vpop.xlane.xlu0 %1232
        %v1234 = vsel %vm308, %v1210, 0.0
        %1235 = vadd.xlane.f32.xlu0 %v1234
        %v1236 = vpop.xlane.xlu0 %1235
        %v1237 = vsel %vm308, %v1211, 0.0
        %1238 = vadd.xlane.f32.xlu0 %v1237
        %v1239 = vpop.xlane.xlu0 %1238
        %v1240 = vsel %vm308, %v1212, 0.0
        %1241 = vadd.xlane.f32.xlu0 %v1240
        %v1242 = vpop.xlane.xlu0 %1241
        %v1243 = vsel %vm308, %v1213, 0.0
        %1244 = vadd.xlane.f32.xlu0 %v1243
        %v1245 = vpop.xlane.xlu0 %1244
        %v1246 = vsel %vm308, %v1214, 0.0
        %1247 = vadd.xlane.f32.xlu0 %v1246
        %v1248 = vpop.xlane.xlu0 %1247
        %v1249 = vsel %vm308, %v1215, 0.0
        %1250 = vadd.xlane.f32.xlu0 %v1249
        %v1251 = vpop.xlane.xlu0 %1250
        %v1252 = vsel %vm308, %v1216, 0.0
        %1253 = vadd.xlane.f32.xlu0 %v1252
        %v1254 = vpop.xlane.xlu0 %1253
        %v1255 = vsel %vm308, %v1217, 0.0
        %1256 = vadd.xlane.f32.xlu0 %v1255
        %v1257 = vpop.xlane.xlu0 %1256
        %v1258 = vsel %vm308, %v1218, 0.0
        %1259 = vadd.xlane.f32.xlu0 %v1258
        %v1260 = vpop.xlane.xlu0 %1259
        %v1261 = vsel %vm308, %v1219, 0.0
        %1262 = vadd.xlane.f32.xlu0 %v1261
        %v1263 = vpop.xlane.xlu0 %1262
        %v1264 = vsel %vm308, %v1220, 0.0
        %1265 = vadd.xlane.f32.xlu0 %v1264
        %v1266 = vpop.xlane.xlu0 %1265
        %v1267 = vsel %vm308, %v1221, 0.0
        %1268 = vadd.xlane.f32.xlu0 %v1267
        %v1269 = vpop.xlane.xlu0 %1268
        %v1286 = vperm.slane %v1224, %v1009
        %v1287 = vperm.slane %v1227, %v1011
        %v1288 = vsel %vm1013, %v1287, %v1286
        %v1289 = vperm.slane %v1230, %v1015
        %v1290 = vsel %vm1017, %v1289, %v1288
        %v1291 = vperm.slane %v1233, %v1019
        %v1292 = vsel %vm1021, %v1291, %v1290
        %v1293 = vperm.slane %v1236, %v1009
        %v1294 = vperm.slane %v1239, %v1011
        %v1295 = vsel %vm1013, %v1294, %v1293
        %v1296 = vperm.slane %v1242, %v1015
        %v1297 = vsel %vm1017, %v1296, %v1295
        %v1298 = vperm.slane %v1245, %v1019
        %v1299 = vsel %vm1021, %v1298, %v1297
        %v1300 = vperm.slane %v1248, %v1009
        %v1301 = vperm.slane %v1251, %v1011
        %v1302 = vsel %vm1013, %v1301, %v1300
        %v1303 = vperm.slane %v1254, %v1015
        %v1304 = vsel %vm1017, %v1303, %v1302
        %v1305 = vperm.slane %v1257, %v1019
        %v1306 = vsel %vm1021, %v1305, %v1304
        %v1307 = vperm.slane %v1260, %v1009
        %v1308 = vperm.slane %v1263, %v1011
        %v1309 = vsel %vm1013, %v1308, %v1307
        %v1310 = vperm.slane %v1266, %v1015
        %v1311 = vsel %vm1017, %v1310, %v1309
        %v1312 = vperm.slane %v1269, %v1019
        %v1313 = vsel %vm1021, %v1312, %v1311
        %v1314 = vsel %vm1044, %v1299, %v1292
        %v1315 = vsel %vm1046, %v1306, %v1314
        %v1316 = vsel %vm1048, %v1313, %v1315
        %v1318 = vsel %vm1051, %v1316, 0.0
        %1319 = vadd.xlane.f32.xlu0 %v1318
        %v1320 = vpop.xlane.xlu0 %1319
        %vm1321 = vcmask 19472
        %1322 = vst.msk [vmem:[%s250] sm:$0xf] %vm1321, %v1320
        %p1323 = scmp.lt.s32.totalorder %s18, 1
        %s1324 = scalar_select %p1323, %s18, 1
        %s1325 = smul.addr %s1324, 4
        %s1326 = scalar_lea.vmem %s3, %s1325
        // Predicated region
        $region45: #{tpu_custom_call.1} parent=31 // pred_check
          %p1327 = pneg %p109
        $region46: #{tpu_custom_call.1} parent=31 // pred_check_branch
          %1329 = sbr.rel (%p1327) target = $region48
        $region47: #{tpu_custom_call.1} parent=31 // pred_region
          _
        $region48: #{tpu_custom_call.1} parent=31 // pred_fallthru
          _
      $region32: #{tpu_custom_call.1} parent=5 // pred_fallthru
        _
      %p1330 = scmp.le.s32.totalorder 2, %s13
      // Predicated region
      $region49: #{tpu_custom_call.1} parent=5 // pred_check
        %p1331 = pneg %p1330
      $region50: #{tpu_custom_call.1} parent=5 // pred_check_branch
        %1333 = sbr.rel (%p1331) target = $region52
      $region51: #{tpu_custom_call.1} parent=5 // pred_region
        %s1334 = ssub.s32 %s13, 2
        // Predicated region
        $region53: #{tpu_custom_call.1} parent=51 // pred_check
          %p1335 = pneg %p115
        $region54: #{tpu_custom_call.1} parent=51 // pred_check_branch
          %1337 = sbr.rel (%p1335) target = $region56
        $region55: #{tpu_custom_call.1} parent=51 // pred_region
          %p1338 = scmp.lt.s32.totalorder %s19, 1
          %s1339 = scalar_select %p1338, %s19, 1
          %s1340 = smul.addr %s1339, 4
          %s1341 = scalar_lea.vmem %s3, %s1340
        $region56: #{tpu_custom_call.1} parent=51 // pred_fallthru
          _
      $region52: #{tpu_custom_call.1} parent=5 // pred_fallthru
        _
    $region6: #{tpu_custom_call.1} parent=1 // loop_footer
      %s17 = sadd.s32 1, %s13
    $region7: #{tpu_custom_call.1} parent=1 // loop_footer_branch
      %12 = sbr.rel target = $region3
    $region8: #{tpu_custom_call.1} parent=1 // loop_exit
      _
    %1342 = vsyncpa [#allocation3], 1
    %s1343 = scalar_lea.sflag [#allocation3], 1
    %1344 = vsyncpa %s1343, 1
    %1345 = vsyncpa [#allocation5], 1
    %s1346 = scalar_lea.sflag [#allocation5], 1
    %1347 = vsyncpa %s1346, 1

</llo_original>
